<compile_context>
chip_gen: v7x
topology: tpu7x:2x2x1
jax: 0.10.0
libtpu: 0.0.40
codegen_flags: <defaults>
</compile_context>

<pallas_src>
import jax
import jax.numpy as jnp
from jax import lax
from jax.experimental import pallas as pl
from jax.experimental.pallas import tpu as pltpu


# ---------------------------------------------------------------------------
# Kernel
# ---------------------------------------------------------------------------
def _make_kernel(n_genres, n_tags, hot_dtype):
    """Kernel factory; n_genres / n_tags / hot_dtype are static."""

    def kernel(idx_ref, num_ref, mdev_ref, mpub_ref, mgen_ref, mtag_ref,
               wq_ref, b1_ref, w2_ref, b2_ref, out_ref):
        TB = idx_ref.shape[0]
        idx = idx_ref[...]                                # (TB, 2+G+T) int32

        def field_hot(col0, n_cols, width):
            # Multi-hot count matrix for one ID field, compared only against
            # its own (128-padded) vocab width.  Initialized from the first
            # compare (no zeros init); duplicates correctly count > 1.
            iota = lax.broadcasted_iota(jnp.int32, (TB, width), 1)
            hot = (idx[:, col0:col0 + 1] == iota).astype(hot_dtype)
            for j in range(1, n_cols):                    # static unroll
                hot = hot + (idx[:, col0 + j:col0 + j + 1] == iota).astype(hot_dtype)
            return hot.astype(jnp.float32)                # exact (counts <= 12)

        # Four small MXU pushes accumulate into one f32 (TB, 128) result.
        # Each push == embedding gather + scaling/mean + fc1 slice, fused.
        h = jnp.dot(field_hot(0, 1, mdev_ref.shape[0]), mdev_ref[...],
                    preferred_element_type=jnp.float32)
        h = h + jnp.dot(field_hot(1, 1, mpub_ref.shape[0]), mpub_ref[...],
                        preferred_element_type=jnp.float32)
        h = h + jnp.dot(field_hot(2, n_genres, mgen_ref.shape[0]), mgen_ref[...],
                        preferred_element_type=jnp.float32)
        h = h + jnp.dot(field_hot(2 + n_genres, n_tags, mtag_ref.shape[0]),
                        mtag_ref[...], preferred_element_type=jnp.float32)

        # Numeric Linear(2, E) folded through fc1 -> two VPU broadcast FMAs.
        num = num_ref[...]                                # (TB, 2)
        h = h + num[:, 0:1] * wq_ref[0:1, :] + num[:, 1:2] * wq_ref[1:2, :]
        h = jnp.maximum(h + b1_ref[...], 0.0)             # folded bias + ReLU

        # fc2 (unpadded 64-wide output block: half the HBM writeback of the
        # 128-padded variant, no wrapper-side slice).
        out_ref[...] = (jnp.dot(h, w2_ref[...], preferred_element_type=jnp.float32)
                        + b2_ref[...])

    return kernel


def _default_hot_dtype():
    # bf16 VALU exists on v6e / v7x: packed bf16 halves the vregs of the
    # binding compare/add loop and counts <= 12 are exact.  Older chips
    # (v2-v5: no bf16 VALU) keep f32.
    try:
        kind = jax.devices()[0].device_kind.lower()
    except Exception:
        return jnp.float32
    if "v6" in kind or "7" in kind:
        return jnp.bfloat16
    return jnp.float32


# ---------------------------------------------------------------------------
# Parameters + one-time weight folding (hoisted out of the per-call path)
# ---------------------------------------------------------------------------
def init_params(key, dev_vocab, pub_vocab, gen_vocab, tag_vocab, emb_dim=32):
    ks = jax.random.split(key, 10)
    f32 = jnp.float32
    scale = 0.1
    return {
        "dev_table": jax.random.normal(ks[0], (dev_vocab, emb_dim), f32),
        "pub_table": jax.random.normal(ks[1], (pub_vocab, emb_dim), f32),
        "gen_table": jax.random.normal(ks[2], (gen_vocab, emb_dim), f32),
        "tag_table": jax.random.normal(ks[3], (tag_vocab, emb_dim), f32),
        # Linear weights stored as (in, out) = W.T of the PyTorch layout.
        "w_num": scale * jax.random.normal(ks[4], (2, emb_dim), f32),
        "b_num": scale * jax.random.normal(ks[5], (1, emb_dim), f32),
        "w1":    scale * jax.random.normal(ks[6], (5 * emb_dim, 128), f32),
        "b1":    scale * jax.random.normal(ks[7], (1, 128), f32),
        "w2":    scale * jax.random.normal(ks[8], (128, 64), f32),
        "b2":    scale * jax.random.normal(ks[9], (1, 64), f32),
    }


def fold_params(params, n_genres, n_tags):
    """Batch-independent folding, done ONCE at parameter-load time.

    Each embedding table is pre-contracted with its fc1 slice (with the 1.5x
    dev/pub scaling and 1/G, 1/T means baked in) and padded to its own
    128-multiple vocab width; the numeric Linear is folded through fc1.
    """
    f32 = jnp.float32
    dev_t, pub_t = params["dev_table"], params["pub_table"]
    gen_t, tag_t = params["gen_table"], params["tag_table"]
    w1, b1 = params["w1"], params["b1"]
    E = dev_t.shape[1]
    H1 = w1.shape[1]

    def pad_rows(m):
        v = m.shape[0]
        vp = pl.cdiv(v, 128) * 128
        if vp == v:
            return m.astype(f32)
        return jnp.zeros((vp, H1), f32).at[:v, :].set(m)

    return {
        "m_dev": pad_rows(dev_t @ (1.5 * w1[0 * E:1 * E])),
        "m_pub": pad_rows(pub_t @ (1.5 * w1[1 * E:2 * E])),
        "m_gen": pad_rows(gen_t @ (w1[2 * E:3 * E] / n_genres)),
        "m_tag": pad_rows(tag_t @ (w1[3 * E:4 * E] / n_tags)),
        "w_num": (params["w_num"] @ w1[4 * E:5 * E]).astype(f32),      # (2, H1)
        "b1":    (params["b_num"] @ w1[4 * E:5 * E] + b1).astype(f32), # (1, H1)
        "w2":    params["w2"].astype(f32),                             # (H1, 64)
        "b2":    params["b2"].astype(f32),                             # (1, 64)
        "n_genres": n_genres,
        "n_tags": n_tags,
    }


# ---------------------------------------------------------------------------
# Forward wrapper
# ---------------------------------------------------------------------------
def game_recommendation_forward(folded, developer, publisher, genres, tags,
                                numeric_feats, *, tile_b=1024):
    f32 = jnp.float32
    G = folded["n_genres"]
    T = folded["n_tags"]
    H1 = folded["m_dev"].shape[1]      # 128
    H2 = folded["w2"].shape[1]         # 64

    # Stack the (field-local, un-offset) integer ids: [dev | pub | genres | tags].
    idx = jnp.concatenate([
        developer[:, None].astype(jnp.int32),
        publisher[:, None].astype(jnp.int32),
        genres.astype(jnp.int32),
        tags.astype(jnp.int32),
    ], axis=1)
    n_ids = idx.shape[1]
    B = idx.shape[0]

    # Batch tile: as large as possible (amortize ~0.35us/step + narrow DMAs),
    # but capped so the grid keeps >= 2 steps when B allows it, so v7x can
    # shard the "parallel" batch axis across its two TensorCores.
    half = pl.cdiv(pl.cdiv(B, 2), 8) * 8
    TB = max(8, min(tile_b, half))
    Bp = pl.cdiv(B, TB) * TB

    num_feats = numeric_feats.astype(f32)
    if Bp != B:
        # Padded rows produce garbage output rows; they are sliced off below.
        idx = jnp.pad(idx, ((0, Bp - B), (0, 0)))
        num_feats = jnp.pad(num_feats, ((0, Bp - B), (0, 0)))

    const = lambda i: (0, 0)
    kernel = _make_kernel(G, T, _default_hot_dtype())

    out = pl.pallas_call(
        kernel,
        out_shape=jax.ShapeDtypeStruct((Bp, H2), f32),
        grid_spec=pltpu.PrefetchScalarGridSpec(
            num_scalar_prefetch=0,
            grid=(Bp // TB,),
            in_specs=[
                pl.BlockSpec((TB, n_ids), lambda i: (i, 0)),     # stacked ids
                pl.BlockSpec((TB, 2), lambda i: (i, 0)),         # numeric feats
                pl.BlockSpec(folded["m_dev"].shape, const),      # dev block of fc1
                pl.BlockSpec(folded["m_pub"].shape, const),      # pub block of fc1
                pl.BlockSpec(folded["m_gen"].shape, const),      # genre block of fc1
                pl.BlockSpec(folded["m_tag"].shape, const),      # tag block of fc1
                pl.BlockSpec((2, H1), const),                    # folded numeric weight
                pl.BlockSpec((1, H1), const),                    # folded fc1 bias
                pl.BlockSpec((H1, H2), const),                   # fc2 weight
                pl.BlockSpec((1, H2), const),                    # fc2 bias
            ],
            out_specs=pl.BlockSpec((TB, H2), lambda i: (i, 0)),
        ),
        compiler_params=pltpu.CompilerParams(
            dimension_semantics=("parallel",),   # shard batch over both TCs on v7x
        ),
    )(idx, num_feats, folded["m_dev"], folded["m_pub"], folded["m_gen"],
      folded["m_tag"], folded["w_num"], folded["b1"], folded["w2"], folded["b2"])

    return out if Bp == B else out[:B]


# ---------------------------------------------------------------------------
# Pure-JAX reference (mirrors the PyTorch module)
# ---------------------------------------------------------------------------
def reference_forward(params, developer, publisher, genres, tags, numeric_feats):
    dev = params["dev_table"][developer] * 1.5
    pub = params["pub_table"][publisher] * 1.5
    gen = params["gen_table"][genres].mean(axis=1)
    tag = params["tag_table"][tags].mean(axis=1)
    num = numeric_feats @ params["w_num"] + params["b_num"]
    combined = jnp.concatenate([dev, pub, gen, tag, num], axis=1)
    h = jnp.maximum(combined @ params["w1"] + params["b1"], 0.0)
    return h @ params["w2"] + params["b2"]


if __name__ == "__main__":
    # Small, deterministic problem sizes.
    B, EMB = 8, 32
    DEV_V, PUB_V, GEN_V, TAG_V = 50, 40, 20, 60
    N_GENRES, N_TAGS = 4, 6

    key = jax.random.PRNGKey(0)
    k_par, k_dev, k_pub, k_gen, k_tag, k_num = jax.random.split(key, 6)

    params = init_params(k_par, DEV_V, PUB_V, GEN_V, TAG_V, EMB)
    folded = fold_params(params, N_GENRES, N_TAGS)   # one-time, param-load path

    developer = jax.random.randint(k_dev, (B,), 0, DEV_V, dtype=jnp.int32)
    publisher = jax.random.randint(k_pub, (B,), 0, PUB_V, dtype=jnp.int32)
    genres = jax.random.randint(k_gen, (B, N_GENRES), 0, GEN_V, dtype=jnp.int32)
    tags = jax.random.randint(k_tag, (B, N_TAGS), 0, TAG_V, dtype=jnp.int32)
    numeric_feats = jax.random.normal(k_num, (B, 2), jnp.float32)

    out = game_recommendation_forward(params if False else folded, developer,
                                      publisher, genres, tags, numeric_feats)
    out = jax.block_until_ready(out)

    ref = reference_forward(params, developer, publisher, genres, tags,
                            numeric_feats)
    assert out.shape == (B, 64)
    assert jnp.allclose(out, ref, rtol=1e-4, atol=1e-4), "mismatch vs reference"

    print("KERNEL_OK")
</pallas_src>

<mosaic_0001>
module attributes {stable_mosaic.version = 11 : i64} {
  func.func @kernel(%arg0: i32, %arg1: memref<8x12xi32, #tpu.memory_space<vmem>>, %arg2: memref<8x2xf32, #tpu.memory_space<vmem>>, %arg3: memref<128x128xf32, #tpu.memory_space<vmem>>, %arg4: memref<128x128xf32, #tpu.memory_space<vmem>>, %arg5: memref<128x128xf32, #tpu.memory_space<vmem>>, %arg6: memref<128x128xf32, #tpu.memory_space<vmem>>, %arg7: memref<2x128xf32, #tpu.memory_space<vmem>>, %arg8: memref<1x128xf32, #tpu.memory_space<vmem>>, %arg9: memref<128x64xf32, #tpu.memory_space<vmem>>, %arg10: memref<1x64xf32, #tpu.memory_space<vmem>>, %arg11: memref<8x64xf32, #tpu.memory_space<vmem>>) attributes {dimension_semantics = [#tpu.dimension_semantics<parallel>], iteration_bounds = array<i64: 1>, scalar_prefetch = 0 : i64, scratch_operands = 0 : i64, tpu.core_type = #tpu.core_type<tc>, window_params = [{transform_indices = @transform_0, window_bounds = array<i64: 8, 12>}, {transform_indices = @transform_1, window_bounds = array<i64: 8, 2>}, {pipeline_mode = #tpu.pipeline_mode<synchronous>, transform_indices = @transform_2, window_bounds = array<i64: 128, 128>}, {pipeline_mode = #tpu.pipeline_mode<synchronous>, transform_indices = @transform_3, window_bounds = array<i64: 128, 128>}, {pipeline_mode = #tpu.pipeline_mode<synchronous>, transform_indices = @transform_4, window_bounds = array<i64: 128, 128>}, {pipeline_mode = #tpu.pipeline_mode<synchronous>, transform_indices = @transform_5, window_bounds = array<i64: 128, 128>}, {pipeline_mode = #tpu.pipeline_mode<synchronous>, transform_indices = @transform_6, window_bounds = array<i64: 2, 128>}, {pipeline_mode = #tpu.pipeline_mode<synchronous>, transform_indices = @transform_7, window_bounds = array<i64: 1, 128>}, {pipeline_mode = #tpu.pipeline_mode<synchronous>, transform_indices = @transform_8, window_bounds = array<i64: 128, 64>}, {pipeline_mode = #tpu.pipeline_mode<synchronous>, transform_indices = @transform_9, window_bounds = array<i64: 1, 64>}, {transform_indices = @transform_10, window_bounds = array<i64: 8, 64>}]} {
    %c0 = arith.constant 0 : index
    %c0_0 = arith.constant 0 : index
    %0 = vector.load %arg1[%c0, %c0_0] : memref<8x12xi32, #tpu.memory_space<vmem>>, vector<8x12xi32>
    %1 = tpu.iota {dimensions = array<i32: 1>} : vector<8x128xi32>
    %2 = vector.extract_strided_slice %0 {offsets = [0, 0], sizes = [8, 1], strides = [1, 1]} : vector<8x12xi32> to vector<8x1xi32>
    %3 = vector.broadcast %2 : vector<8x1xi32> to vector<8x128xi32>
    %4 = arith.cmpi eq, %3, %1 : vector<8x128xi32>
    %5 = arith.extui %4 : vector<8x128xi1> to vector<8x128xi32>
    %6 = arith.sitofp %5 : vector<8x128xi32> to vector<8x128xf32>
    %c0_1 = arith.constant 0 : index
    %c0_2 = arith.constant 0 : index
    %7 = vector.load %arg3[%c0_1, %c0_2] : memref<128x128xf32, #tpu.memory_space<vmem>>, vector<128x128xf32>
    %cst = arith.constant dense<0.000000e+00> : vector<8x128xf32>
    %8 = tpu.matmul %6, %7, %cst {dimension_numbers = #tpu.dot_dimension_numbers<[1], [0], [0], [1], [0, 0, 1, 1], [], []>} : vector<8x128xf32>, vector<128x128xf32>, vector<8x128xf32> -> vector<8x128xf32>
    %9 = tpu.iota {dimensions = array<i32: 1>} : vector<8x128xi32>
    %10 = vector.extract_strided_slice %0 {offsets = [0, 1], sizes = [8, 1], strides = [1, 1]} : vector<8x12xi32> to vector<8x1xi32>
    %11 = vector.broadcast %10 : vector<8x1xi32> to vector<8x128xi32>
    %12 = arith.cmpi eq, %11, %9 : vector<8x128xi32>
    %13 = arith.extui %12 : vector<8x128xi1> to vector<8x128xi32>
    %14 = arith.sitofp %13 : vector<8x128xi32> to vector<8x128xf32>
    %c0_3 = arith.constant 0 : index
    %c0_4 = arith.constant 0 : index
    %15 = vector.load %arg4[%c0_3, %c0_4] : memref<128x128xf32, #tpu.memory_space<vmem>>, vector<128x128xf32>
    %cst_5 = arith.constant dense<0.000000e+00> : vector<8x128xf32>
    %16 = tpu.matmul %14, %15, %cst_5 {dimension_numbers = #tpu.dot_dimension_numbers<[1], [0], [0], [1], [0, 0, 1, 1], [], []>} : vector<8x128xf32>, vector<128x128xf32>, vector<8x128xf32> -> vector<8x128xf32>
    %17 = arith.addf %8, %16 : vector<8x128xf32>
    %18 = tpu.iota {dimensions = array<i32: 1>} : vector<8x128xi32>
    %19 = vector.extract_strided_slice %0 {offsets = [0, 2], sizes = [8, 1], strides = [1, 1]} : vector<8x12xi32> to vector<8x1xi32>
    %20 = vector.broadcast %19 : vector<8x1xi32> to vector<8x128xi32>
    %21 = arith.cmpi eq, %20, %18 : vector<8x128xi32>
    %22 = arith.extui %21 : vector<8x128xi1> to vector<8x128xi32>
    %23 = arith.sitofp %22 : vector<8x128xi32> to vector<8x128xf32>
    %24 = vector.extract_strided_slice %0 {offsets = [0, 3], sizes = [8, 1], strides = [1, 1]} : vector<8x12xi32> to vector<8x1xi32>
    %25 = vector.broadcast %24 : vector<8x1xi32> to vector<8x128xi32>
    %26 = arith.cmpi eq, %25, %18 : vector<8x128xi32>
    %27 = arith.extui %26 : vector<8x128xi1> to vector<8x128xi32>
    %28 = arith.sitofp %27 : vector<8x128xi32> to vector<8x128xf32>
    %29 = arith.addf %23, %28 : vector<8x128xf32>
    %30 = vector.extract_strided_slice %0 {offsets = [0, 4], sizes = [8, 1], strides = [1, 1]} : vector<8x12xi32> to vector<8x1xi32>
    %31 = vector.broadcast %30 : vector<8x1xi32> to vector<8x128xi32>
    %32 = arith.cmpi eq, %31, %18 : vector<8x128xi32>
    %33 = arith.extui %32 : vector<8x128xi1> to vector<8x128xi32>
    %34 = arith.sitofp %33 : vector<8x128xi32> to vector<8x128xf32>
    %35 = arith.addf %29, %34 : vector<8x128xf32>
    %36 = vector.extract_strided_slice %0 {offsets = [0, 5], sizes = [8, 1], strides = [1, 1]} : vector<8x12xi32> to vector<8x1xi32>
    %37 = vector.broadcast %36 : vector<8x1xi32> to vector<8x128xi32>
    %38 = arith.cmpi eq, %37, %18 : vector<8x128xi32>
    %39 = arith.extui %38 : vector<8x128xi1> to vector<8x128xi32>
    %40 = arith.sitofp %39 : vector<8x128xi32> to vector<8x128xf32>
    %41 = arith.addf %35, %40 : vector<8x128xf32>
    %c0_6 = arith.constant 0 : index
    %c0_7 = arith.constant 0 : index
    %42 = vector.load %arg5[%c0_6, %c0_7] : memref<128x128xf32, #tpu.memory_space<vmem>>, vector<128x128xf32>
    %cst_8 = arith.constant dense<0.000000e+00> : vector<8x128xf32>
    %43 = tpu.matmul %41, %42, %cst_8 {dimension_numbers = #tpu.dot_dimension_numbers<[1], [0], [0], [1], [0, 0, 1, 1], [], []>} : vector<8x128xf32>, vector<128x128xf32>, vector<8x128xf32> -> vector<8x128xf32>
    %44 = arith.addf %17, %43 : vector<8x128xf32>
    %45 = tpu.iota {dimensions = array<i32: 1>} : vector<8x128xi32>
    %46 = vector.extract_strided_slice %0 {offsets = [0, 6], sizes = [8, 1], strides = [1, 1]} : vector<8x12xi32> to vector<8x1xi32>
    %47 = vector.broadcast %46 : vector<8x1xi32> to vector<8x128xi32>
    %48 = arith.cmpi eq, %47, %45 : vector<8x128xi32>
    %49 = arith.extui %48 : vector<8x128xi1> to vector<8x128xi32>
    %50 = arith.sitofp %49 : vector<8x128xi32> to vector<8x128xf32>
    %51 = vector.extract_strided_slice %0 {offsets = [0, 7], sizes = [8, 1], strides = [1, 1]} : vector<8x12xi32> to vector<8x1xi32>
    %52 = vector.broadcast %51 : vector<8x1xi32> to vector<8x128xi32>
    %53 = arith.cmpi eq, %52, %45 : vector<8x128xi32>
    %54 = arith.extui %53 : vector<8x128xi1> to vector<8x128xi32>
    %55 = arith.sitofp %54 : vector<8x128xi32> to vector<8x128xf32>
    %56 = arith.addf %50, %55 : vector<8x128xf32>
    %57 = vector.extract_strided_slice %0 {offsets = [0, 8], sizes = [8, 1], strides = [1, 1]} : vector<8x12xi32> to vector<8x1xi32>
    %58 = vector.broadcast %57 : vector<8x1xi32> to vector<8x128xi32>
    %59 = arith.cmpi eq, %58, %45 : vector<8x128xi32>
    %60 = arith.extui %59 : vector<8x128xi1> to vector<8x128xi32>
    %61 = arith.sitofp %60 : vector<8x128xi32> to vector<8x128xf32>
    %62 = arith.addf %56, %61 : vector<8x128xf32>
    %63 = vector.extract_strided_slice %0 {offsets = [0, 9], sizes = [8, 1], strides = [1, 1]} : vector<8x12xi32> to vector<8x1xi32>
    %64 = vector.broadcast %63 : vector<8x1xi32> to vector<8x128xi32>
    %65 = arith.cmpi eq, %64, %45 : vector<8x128xi32>
    %66 = arith.extui %65 : vector<8x128xi1> to vector<8x128xi32>
    %67 = arith.sitofp %66 : vector<8x128xi32> to vector<8x128xf32>
    %68 = arith.addf %62, %67 : vector<8x128xf32>
    %69 = vector.extract_strided_slice %0 {offsets = [0, 10], sizes = [8, 1], strides = [1, 1]} : vector<8x12xi32> to vector<8x1xi32>
    %70 = vector.broadcast %69 : vector<8x1xi32> to vector<8x128xi32>
    %71 = arith.cmpi eq, %70, %45 : vector<8x128xi32>
    %72 = arith.extui %71 : vector<8x128xi1> to vector<8x128xi32>
    %73 = arith.sitofp %72 : vector<8x128xi32> to vector<8x128xf32>
    %74 = arith.addf %68, %73 : vector<8x128xf32>
    %75 = vector.extract_strided_slice %0 {offsets = [0, 11], sizes = [8, 1], strides = [1, 1]} : vector<8x12xi32> to vector<8x1xi32>
    %76 = vector.broadcast %75 : vector<8x1xi32> to vector<8x128xi32>
    %77 = arith.cmpi eq, %76, %45 : vector<8x128xi32>
    %78 = arith.extui %77 : vector<8x128xi1> to vector<8x128xi32>
    %79 = arith.sitofp %78 : vector<8x128xi32> to vector<8x128xf32>
    %80 = arith.addf %74, %79 : vector<8x128xf32>
    %c0_9 = arith.constant 0 : index
    %c0_10 = arith.constant 0 : index
    %81 = vector.load %arg6[%c0_9, %c0_10] : memref<128x128xf32, #tpu.memory_space<vmem>>, vector<128x128xf32>
    %cst_11 = arith.constant dense<0.000000e+00> : vector<8x128xf32>
    %82 = tpu.matmul %80, %81, %cst_11 {dimension_numbers = #tpu.dot_dimension_numbers<[1], [0], [0], [1], [0, 0, 1, 1], [], []>} : vector<8x128xf32>, vector<128x128xf32>, vector<8x128xf32> -> vector<8x128xf32>
    %83 = arith.addf %44, %82 : vector<8x128xf32>
    %c0_12 = arith.constant 0 : index
    %c0_13 = arith.constant 0 : index
    %84 = vector.load %arg2[%c0_12, %c0_13] : memref<8x2xf32, #tpu.memory_space<vmem>>, vector<8x2xf32>
    %85 = vector.extract_strided_slice %84 {offsets = [0, 0], sizes = [8, 1], strides = [1, 1]} : vector<8x2xf32> to vector<8x1xf32>
    %c0_14 = arith.constant 0 : index
    %c0_15 = arith.constant 0 : index
    %86 = vector.load %arg7[%c0_14, %c0_15] : memref<2x128xf32, #tpu.memory_space<vmem>>, vector<1x128xf32>
    %87 = vector.broadcast %85 : vector<8x1xf32> to vector<8x128xf32>
    %88 = vector.broadcast %86 : vector<1x128xf32> to vector<8x128xf32>
    %89 = arith.mulf %87, %88 : vector<8x128xf32>
    %90 = arith.addf %83, %89 : vector<8x128xf32>
    %91 = vector.extract_strided_slice %84 {offsets = [0, 1], sizes = [8, 1], strides = [1, 1]} : vector<8x2xf32> to vector<8x1xf32>
    %c1 = arith.constant 1 : index
    %c0_16 = arith.constant 0 : index
    %92 = vector.load %arg7[%c1, %c0_16] : memref<2x128xf32, #tpu.memory_space<vmem>>, vector<1x128xf32>
    %93 = vector.broadcast %91 : vector<8x1xf32> to vector<8x128xf32>
    %94 = vector.broadcast %92 : vector<1x128xf32> to vector<8x128xf32>
    %95 = arith.mulf %93, %94 : vector<8x128xf32>
    %96 = arith.addf %90, %95 : vector<8x128xf32>
    %c0_17 = arith.constant 0 : index
    %c0_18 = arith.constant 0 : index
    %97 = vector.load %arg8[%c0_17, %c0_18] : memref<1x128xf32, #tpu.memory_space<vmem>>, vector<1x128xf32>
    %98 = vector.broadcast %97 : vector<1x128xf32> to vector<8x128xf32>
    %99 = arith.addf %96, %98 : vector<8x128xf32>
    %cst_19 = arith.constant 0.000000e+00 : f32
    %100 = vector.broadcast %cst_19 : f32 to vector<8x128xf32>
    %101 = arith.maximumf %99, %100 : vector<8x128xf32>
    %c0_20 = arith.constant 0 : index
    %c0_21 = arith.constant 0 : index
    %102 = vector.load %arg9[%c0_20, %c0_21] : memref<128x64xf32, #tpu.memory_space<vmem>>, vector<128x64xf32>
    %cst_22 = arith.constant dense<0.000000e+00> : vector<8x64xf32>
    %103 = tpu.matmul %101, %102, %cst_22 {dimension_numbers = #tpu.dot_dimension_numbers<[1], [0], [0], [1], [0, 0, 1, 1], [], []>} : vector<8x128xf32>, vector<128x64xf32>, vector<8x64xf32> -> vector<8x64xf32>
    %c0_23 = arith.constant 0 : index
    %c0_24 = arith.constant 0 : index
    %104 = vector.load %arg10[%c0_23, %c0_24] : memref<1x64xf32, #tpu.memory_space<vmem>>, vector<1x64xf32>
    %105 = vector.broadcast %104 : vector<1x64xf32> to vector<8x64xf32>
    %106 = arith.addf %103, %105 : vector<8x64xf32>
    %c0_25 = arith.constant 0 : index
    %c0_26 = arith.constant 0 : index
    %107 = vector.load %arg11[%c0_25, %c0_26] : memref<8x64xf32, #tpu.memory_space<vmem>>, vector<8x64xf32>
    tpu.vector_store %arg11[%c0_25, %c0_26], %106 {strides = array<i32>} : memref<8x64xf32, #tpu.memory_space<vmem>>, vector<8x64xf32>,
    return
  }
  func.func @transform_0(%arg0: i32) -> (i32, i32) {
    %c0_i32 = arith.constant 0 : i32
    %c0_i32_0 = arith.constant 0 : i32
    return %arg0, %c0_i32 : i32, i32
  }
  func.func @transform_1(%arg0: i32) -> (i32, i32) {
    %c0_i32 = arith.constant 0 : i32
    %c0_i32_0 = arith.constant 0 : i32
    return %arg0, %c0_i32 : i32, i32
  }
  func.func @transform_2(%arg0: i32) -> (i32, i32) {
    %c0_i32 = arith.constant 0 : i32
    %c0_i32_0 = arith.constant 0 : i32
    %c0_i32_1 = arith.constant 0 : i32
    return %c0_i32, %c0_i32_0 : i32, i32
  }
  func.func @transform_3(%arg0: i32) -> (i32, i32) {
    %c0_i32 = arith.constant 0 : i32
    %c0_i32_0 = arith.constant 0 : i32
    %c0_i32_1 = arith.constant 0 : i32
    return %c0_i32, %c0_i32_0 : i32, i32
  }
  func.func @transform_4(%arg0: i32) -> (i32, i32) {
    %c0_i32 = arith.constant 0 : i32
    %c0_i32_0 = arith.constant 0 : i32
    %c0_i32_1 = arith.constant 0 : i32
    return %c0_i32, %c0_i32_0 : i32, i32
  }
  func.func @transform_5(%arg0: i32) -> (i32, i32) {
    %c0_i32 = arith.constant 0 : i32
    %c0_i32_0 = arith.constant 0 : i32
    %c0_i32_1 = arith.constant 0 : i32
    return %c0_i32, %c0_i32_0 : i32, i32
  }
  func.func @transform_6(%arg0: i32) -> (i32, i32) {
    %c0_i32 = arith.constant 0 : i32
    %c0_i32_0 = arith.constant 0 : i32
    %c0_i32_1 = arith.constant 0 : i32
    return %c0_i32, %c0_i32_0 : i32, i32
  }
  func.func @transform_7(%arg0: i32) -> (i32, i32) {
    %c0_i32 = arith.constant 0 : i32
    %c0_i32_0 = arith.constant 0 : i32
    %c0_i32_1 = arith.constant 0 : i32
    return %c0_i32, %c0_i32_0 : i32, i32
  }
  func.func @transform_8(%arg0: i32) -> (i32, i32) {
    %c0_i32 = arith.constant 0 : i32
    %c0_i32_0 = arith.constant 0 : i32
    %c0_i32_1 = arith.constant 0 : i32
    return %c0_i32, %c0_i32_0 : i32, i32
  }
  func.func @transform_9(%arg0: i32) -> (i32, i32) {
    %c0_i32 = arith.constant 0 : i32
    %c0_i32_0 = arith.constant 0 : i32
    %c0_i32_1 = arith.constant 0 : i32
    return %c0_i32, %c0_i32_0 : i32, i32
  }
  func.func @transform_10(%arg0: i32) -> (i32, i32) {
    %c0_i32 = arith.constant 0 : i32
    %c0_i32_0 = arith.constant 0 : i32
    return %arg0, %c0_i32 : i32, i32
  }
}

</mosaic_0001>

<llo_original>
// kernel: tpu_custom_call.1
$region0: #{tpu_custom_call.1}
  #allocation0 [shape = 'u32[]', space=smem, size = 0x4, offset = 0x4, fixed_abs, tag = 'smem constant byte address 0x4 - core index']
  #allocation1 [shape = 'u32[144,128]{1,0:T(1,128)}', space=vmem, size = 0x12000, scoped, tag = 'internal scratch']
  %s0 = inlined_call_operand.vmem [shape: s32[8,12], index: 0, kind: input, shape index: {}]
  %s1 = inlined_call_operand.vmem [shape: f32[8,2], index: 1, kind: input, shape index: {}]
  %s2 = inlined_call_operand.vmem [shape: f32[128,128], index: 2, kind: input, shape index: {}]
  %s3 = inlined_call_operand.hbm [shape: f32[128,128], index: 3, kind: input, shape index: {}]
  %s4 = inlined_call_operand.hbm [shape: f32[128,128], index: 4, kind: input, shape index: {}]
  %s5 = inlined_call_operand.hbm [shape: f32[128,128], index: 5, kind: input, shape index: {}]
  %s6 = inlined_call_operand.vmem [shape: f32[2,128], index: 6, kind: input, shape index: {}]
  %s7 = inlined_call_operand.vmem [shape: f32[1,128], index: 7, kind: input, shape index: {}]
  %s8 = inlined_call_operand.vmem [shape: f32[128,64], index: 8, kind: input, shape index: {}]
  %s9 = inlined_call_operand.vmem [shape: f32[1,64], index: 9, kind: input, shape index: {}]
  %s10 = inlined_call_operand.hbm [shape: f32[8,64], index: 10, kind: output, shape index: {}]
  %s11 = sld [smem:[#allocation0]]
  $region62: #{tpu_custom_call.1} parent=0
    _
  %s13 = ssub.s32 1, %s11
  %s14 = scalar_select 0, %s13, %s11
  $region1: #{tpu_custom_call.1} parent=0
    #allocation2 [shape = 'u8[65536]{0}', space=vmem, size = 0x10000, scoped, tag = 'input window, operand 3, single buffered']
    #allocation3 [shape = 's32[1]{0}', space=sflag, size = 0x4, scoped, tag = 'scoped memory for tpu_custom_call.1']
    #allocation4 [shape = 's32[1]{0}', space=sflag, size = 0x4, scoped, tag = 'scoped memory for tpu_custom_call.1']
    #allocation5 [shape = 'u8[65536]{0}', space=vmem, size = 0x10000, scoped, tag = 'input window, operand 4, single buffered']
    #allocation6 [shape = 's32[1]{0}', space=sflag, size = 0x4, scoped, tag = 'scoped memory for tpu_custom_call.1']
    #allocation7 [shape = 'u8[65536]{0}', space=vmem, size = 0x10000, scoped, tag = 'input window, operand 5, single buffered']
    #allocation8 [shape = 'u8[4096]{0}', space=vmem, size = 0x1000, scoped, tag = 'output window, operand 0, single buffered']
    %15 = vsyncpa [#allocation3], 0
    %16 = vsyncpa [#allocation6], 0
    %17 = vsyncpa [#allocation4], 0
    // Predicated region
    $region2: #{tpu_custom_call.1} parent=1 // pred_check
      _
    $region3: #{tpu_custom_call.1} parent=1 // pred_check_branch
      %19 = sbr.rel (0) target = $region5
    $region4: #{tpu_custom_call.1} parent=1 // pred_region
      _
    $region5: #{tpu_custom_call.1} parent=1 // pred_fallthru
      _
    // Predicated region
    $region6: #{tpu_custom_call.1} parent=1 // pred_check
      _
    $region7: #{tpu_custom_call.1} parent=1 // pred_check_branch
      %21 = sbr.rel (0) target = $region9
    $region8: #{tpu_custom_call.1} parent=1 // pred_region
      _
    $region9: #{tpu_custom_call.1} parent=1 // pred_fallthru
      _
    // Predicated region
    $region10: #{tpu_custom_call.1} parent=1 // pred_check
      _
    $region11: #{tpu_custom_call.1} parent=1 // pred_check_branch
      %23 = sbr.rel (0) target = $region13
    $region12: #{tpu_custom_call.1} parent=1 // pred_region
      _
    $region13: #{tpu_custom_call.1} parent=1 // pred_fallthru
      _
    // Predicated region
    $region14: #{tpu_custom_call.1} parent=1 // pred_check
      _
    $region15: #{tpu_custom_call.1} parent=1 // pred_check_branch
      %25 = sbr.rel (0) target = $region17
    $region16: #{tpu_custom_call.1} parent=1 // pred_region
      %s27 = ssub.s32 2048, 2048
      %28 = vsyncadd [#allocation3], %s27
      %s29 = sshll.u32 [#allocation2], 4
      %s30 = int_to_ptr.vmem [resolvable:$true] %s29
      %35 = dma.hbm_to_vmem [thread:$0]  %s3, 2048, %s30, [#allocation3], 128, 128, 8
    $region17: #{tpu_custom_call.1} parent=1 // pred_fallthru
      _
    // Predicated region
    $region18: #{tpu_custom_call.1} parent=1 // pred_check
      _
    $region19: #{tpu_custom_call.1} parent=1 // pred_check_branch
      %37 = sbr.rel (0) target = $region21
    $region20: #{tpu_custom_call.1} parent=1 // pred_region
      %s39 = ssub.s32 2048, 2048
      %40 = vsyncadd [#allocation6], %s39
      %s41 = sshll.u32 [#allocation5], 4
      %s42 = int_to_ptr.vmem [resolvable:$true] %s41
      %47 = dma.hbm_to_vmem [thread:$0]  %s4, 2048, %s42, [#allocation6], 128, 128, 8
    $region21: #{tpu_custom_call.1} parent=1 // pred_fallthru
      _
    // Predicated region
    $region22: #{tpu_custom_call.1} parent=1 // pred_check
      _
    $region23: #{tpu_custom_call.1} parent=1 // pred_check_branch
      %49 = sbr.rel (0) target = $region25
    $region24: #{tpu_custom_call.1} parent=1 // pred_region
      %s51 = ssub.s32 2048, 2048
      %52 = vsyncadd [#allocation6], %s51
      %s53 = sshll.u32 [#allocation7], 4
      %s54 = int_to_ptr.vmem [resolvable:$true] %s53
      %59 = dma.hbm_to_vmem [thread:$0]  %s5, 2048, %s54, [#allocation6], 128, 128, 8
    $region25: #{tpu_custom_call.1} parent=1 // pred_fallthru
      _
    // Predicated region
    $region26: #{tpu_custom_call.1} parent=1 // pred_check
      _
    $region27: #{tpu_custom_call.1} parent=1 // pred_check_branch
      %61 = sbr.rel (0) target = $region29
    $region28: #{tpu_custom_call.1} parent=1 // pred_region
      _
    $region29: #{tpu_custom_call.1} parent=1 // pred_fallthru
      _
    // Predicated region
    $region30: #{tpu_custom_call.1} parent=1 // pred_check
      _
    $region31: #{tpu_custom_call.1} parent=1 // pred_check_branch
      %63 = sbr.rel (0) target = $region33
    $region32: #{tpu_custom_call.1} parent=1 // pred_region
      _
    $region33: #{tpu_custom_call.1} parent=1 // pred_fallthru
      _
    // Predicated region
    $region34: #{tpu_custom_call.1} parent=1 // pred_check
      _
    $region35: #{tpu_custom_call.1} parent=1 // pred_check_branch
      %65 = sbr.rel (0) target = $region37
    $region36: #{tpu_custom_call.1} parent=1 // pred_region
      _
    $region37: #{tpu_custom_call.1} parent=1 // pred_fallthru
      _
    // Predicated region
    $region38: #{tpu_custom_call.1} parent=1 // pred_check
      _
    $region39: #{tpu_custom_call.1} parent=1 // pred_check_branch
      %67 = sbr.rel (0) target = $region41
    $region40: #{tpu_custom_call.1} parent=1 // pred_region
      _
    $region41: #{tpu_custom_call.1} parent=1 // pred_fallthru
      _
    // Predicated region
    $region42: #{tpu_custom_call.1} parent=1 // pred_check
      _
    $region43: #{tpu_custom_call.1} parent=1 // pred_check_branch
      %69 = sbr.rel (0) target = $region45
    $region44: #{tpu_custom_call.1} parent=1 // pred_region
      %70 = dma.done [#allocation3], 2048
    $region45: #{tpu_custom_call.1} parent=1 // pred_fallthru
      _
    // Predicated region
    $region46: #{tpu_custom_call.1} parent=1 // pred_check
      _
    $region47: #{tpu_custom_call.1} parent=1 // pred_check_branch
      %72 = sbr.rel (0) target = $region49
    $region48: #{tpu_custom_call.1} parent=1 // pred_region
      %73 = dma.done [#allocation6], 2048
    $region49: #{tpu_custom_call.1} parent=1 // pred_fallthru
      _
    // Predicated region
    $region50: #{tpu_custom_call.1} parent=1 // pred_check
      _
    $region51: #{tpu_custom_call.1} parent=1 // pred_check_branch
      %75 = sbr.rel (0) target = $region53
    $region52: #{tpu_custom_call.1} parent=1 // pred_region
      %76 = dma.done [#allocation6], 2048
    $region53: #{tpu_custom_call.1} parent=1 // pred_fallthru
      _
    %v77 = vld [vmem:[%s0] sm:$0xff]
    %v78 = vlaneseq
    %v79 = vand.u32 %v78, 127
    %80 = vset.pattern.permute.xlu0 0
    %81 = vperm.xlu0 %80, %v77
    %v82 = vpop.permute.xlu0 %81
    %vm83 = vcmp.eq.s32.totalorder %v82, %v79
    %v84 = vsel %vm83, 1, 0
    %v85 = vcvt.s32.f32 %v84
    %v86 = vld [vmem:[%s2] sm:$0xff]
    %v87 = vld [vmem:[%s2 + $0x8] sm:$0xff]
    %v88 = vld [vmem:[%s2 + $0x10] sm:$0xff]
    %v89 = vld [vmem:[%s2 + $0x18] sm:$0xff]
    %v90 = vld [vmem:[%s2 + $0x20] sm:$0xff]
    %v91 = vld [vmem:[%s2 + $0x28] sm:$0xff]
    %v92 = vld [vmem:[%s2 + $0x30] sm:$0xff]
    %v93 = vld [vmem:[%s2 + $0x38] sm:$0xff]
    %v94 = vld [vmem:[%s2 + $0x40] sm:$0xff]
    %v95 = vld [vmem:[%s2 + $0x48] sm:$0xff]
    %v96 = vld [vmem:[%s2 + $0x50] sm:$0xff]
    %v97 = vld [vmem:[%s2 + $0x58] sm:$0xff]
    %v98 = vld [vmem:[%s2 + $0x60] sm:$0xff]
    %v99 = vld [vmem:[%s2 + $0x68] sm:$0xff]
    %v100 = vld [vmem:[%s2 + $0x70] sm:$0xff]
    %v101 = vld [vmem:[%s2 + $0x78] sm:$0xff]
    %102 = vset.pattern.permute.xlu0 1
    %103 = vperm.xlu0 %102, %v77
    %v104 = vpop.permute.xlu0 %103
    %vm105 = vcmp.eq.s32.totalorder %v104, %v79
    %v106 = vsel %vm105, 1, 0
    %v107 = vcvt.s32.f32 %v106
    %v108 = vld [vmem:[#allocation2] sm:$0xff]
    %v109 = vld [vmem:[#allocation2 + $0x8] sm:$0xff]
    %v110 = vld [vmem:[#allocation2 + $0x10] sm:$0xff]
    %v111 = vld [vmem:[#allocation2 + $0x18] sm:$0xff]
    %v112 = vld [vmem:[#allocation2 + $0x20] sm:$0xff]
    %v113 = vld [vmem:[#allocation2 + $0x28] sm:$0xff]
    %v114 = vld [vmem:[#allocation2 + $0x30] sm:$0xff]
    %v115 = vld [vmem:[#allocation2 + $0x38] sm:$0xff]
    %v116 = vld [vmem:[#allocation2 + $0x40] sm:$0xff]
    %v117 = vld [vmem:[#allocation2 + $0x48] sm:$0xff]
    %v118 = vld [vmem:[#allocation2 + $0x50] sm:$0xff]
    %v119 = vld [vmem:[#allocation2 + $0x58] sm:$0xff]
    %v120 = vld [vmem:[#allocation2 + $0x60] sm:$0xff]
    %v121 = vld [vmem:[#allocation2 + $0x68] sm:$0xff]
    %v122 = vld [vmem:[#allocation2 + $0x70] sm:$0xff]
    %v123 = vld [vmem:[#allocation2 + $0x78] sm:$0xff]
    %124 = vmatprep.subr.mxu0 0.0
    %125 = vmatpush1.msra.mxu0 %v108
    %126 = vmatprep.subr.mxu0 0.0
    %127 = vmatpush1.msra.mxu0 %v109
    %128 = vmatprep.subr.mxu0 0.0
    %129 = vmatpush1.msra.mxu0 %v110
    %130 = vmatprep.subr.mxu0 0.0
    %131 = vmatpush1.msra.mxu0 %v111
    %132 = vmatprep.subr.mxu0 0.0
    %133 = vmatpush1.msra.mxu0 %v112
    %134 = vmatprep.subr.mxu0 0.0
    %135 = vmatpush1.msra.mxu0 %v113
    %136 = vmatprep.subr.mxu0 0.0
    %137 = vmatpush1.msra.mxu0 %v114
    %138 = vmatprep.subr.mxu0 0.0
    %139 = vmatpush1.msra.mxu0 %v115
    %140 = vmatprep.subr.mxu0 0.0
    %141 = vmatpush1.msra.mxu0 %v116
    %142 = vmatprep.subr.mxu0 0.0
    %143 = vmatpush1.msra.mxu0 %v117
    %144 = vmatprep.subr.mxu0 0.0
    %145 = vmatpush1.msra.mxu0 %v118
    %146 = vmatprep.subr.mxu0 0.0
    %147 = vmatpush1.msra.mxu0 %v119
    %148 = vmatprep.subr.mxu0 0.0
    %149 = vmatpush1.msra.mxu0 %v120
    %150 = vmatprep.subr.mxu0 0.0
    %151 = vmatpush1.msra.mxu0 %v121
    %152 = vmatprep.subr.mxu0 0.0
    %153 = vmatpush1.msra.mxu0 %v122
    %154 = vmatprep.subr.mxu0 0.0
    %155 = vmatpush1.msra.mxu0 %v123
    %156 = vmatprep.subr.mxu0 0.0
    %157 = vmatpush1.msra.mxu0 0.0
    %158 = vmatprep.subr.mxu0 0.0
    %159 = vmatpush1.msra.mxu0 0.0
    %160 = vmatprep.subr.mxu0 0.0
    %161 = vmatpush1.msra.mxu0 0.0
    %162 = vmatprep.subr.mxu0 0.0
    %163 = vmatpush1.msra.mxu0 0.0
    %164 = vmatprep.subr.mxu0 0.0
    %165 = vmatpush1.msra.mxu0 0.0
    %166 = vmatprep.subr.mxu0 0.0
    %167 = vmatpush1.msra.mxu0 0.0
    %168 = vmatprep.subr.mxu0 0.0
    %169 = vmatpush1.msra.mxu0 0.0
    %170 = vmatprep.subr.mxu0 0.0
    %171 = vmatpush1.msra.mxu0 0.0
    %172 = vmatprep.subr.mxu0 0.0
    %173 = vmatpush1.msra.mxu0 0.0
    %174 = vmatprep.subr.mxu0 0.0
    %175 = vmatpush1.msra.mxu0 0.0
    %176 = vmatprep.subr.mxu0 0.0
    %177 = vmatpush1.msra.mxu0 0.0
    %178 = vmatprep.subr.mxu0 0.0
    %179 = vmatpush1.msra.mxu0 0.0
    %180 = vmatprep.subr.mxu0 0.0
    %181 = vmatpush1.msra.mxu0 0.0
    %182 = vmatprep.subr.mxu0 0.0
    %183 = vmatpush1.msra.mxu0 0.0
    %184 = vmatprep.subr.mxu0 0.0
    %185 = vmatpush1.msra.mxu0 0.0
    %186 = vmatprep.subr.mxu0 0.0
    %187 = vmatpush1.msra.mxu0 0.0
    %188 = vmatprep.mubr.f32.mxu0 0.0
    %189 = vmatmul.mubr.f32.gmra.mrb[0].mxu0 %v107
    %v190 = vpop.f32.mrb[0].mxu0
    %v191 = vadd.f32 0.0, %v190
    %v192 = vpop.f32.mrb[0].mxu0
    %193 = vdwg.mxu0
    %194 = vmatprep.subr.mxu0 0.0
    %195 = vmatpush1.msra.mxu0 %v86
    %196 = vmatprep.subr.mxu0 0.0
    %197 = vmatpush1.msra.mxu0 %v87
    %198 = vmatprep.subr.mxu0 0.0
    %199 = vmatpush1.msra.mxu0 %v88
    %200 = vmatprep.subr.mxu0 0.0
    %201 = vmatpush1.msra.mxu0 %v89
    %202 = vmatprep.subr.mxu0 0.0
    %203 = vmatpush1.msra.mxu0 %v90
    %204 = vmatprep.subr.mxu0 0.0
    %205 = vmatpush1.msra.mxu0 %v91
    %206 = vmatprep.subr.mxu0 0.0
    %207 = vmatpush1.msra.mxu0 %v92
    %208 = vmatprep.subr.mxu0 0.0
    %209 = vmatpush1.msra.mxu0 %v93
    %210 = vmatprep.subr.mxu0 0.0
    %211 = vmatpush1.msra.mxu0 %v94
    %212 = vmatprep.subr.mxu0 0.0
    %213 = vmatpush1.msra.mxu0 %v95
    %214 = vmatprep.subr.mxu0 0.0
    %215 = vmatpush1.msra.mxu0 %v96
    %216 = vmatprep.subr.mxu0 0.0
    %217 = vmatpush1.msra.mxu0 %v97
    %218 = vmatprep.subr.mxu0 0.0
    %219 = vmatpush1.msra.mxu0 %v98
    %220 = vmatprep.subr.mxu0 0.0
    %221 = vmatpush1.msra.mxu0 %v99
    %222 = vmatprep.subr.mxu0 0.0
    %223 = vmatpush1.msra.mxu0 %v100
    %224 = vmatprep.subr.mxu0 0.0
    %225 = vmatpush1.msra.mxu0 %v101
    %226 = vmatprep.subr.mxu0 0.0
    %227 = vmatpush1.msra.mxu0 0.0
    %228 = vmatprep.subr.mxu0 0.0
    %229 = vmatpush1.msra.mxu0 0.0
    %230 = vmatprep.subr.mxu0 0.0
    %231 = vmatpush1.msra.mxu0 0.0
    %232 = vmatprep.subr.mxu0 0.0
    %233 = vmatpush1.msra.mxu0 0.0
    %234 = vmatprep.subr.mxu0 0.0
    %235 = vmatpush1.msra.mxu0 0.0
    %236 = vmatprep.subr.mxu0 0.0
    %237 = vmatpush1.msra.mxu0 0.0
    %238 = vmatprep.subr.mxu0 0.0
    %239 = vmatpush1.msra.mxu0 0.0
    %240 = vmatprep.subr.mxu0 0.0
    %241 = vmatpush1.msra.mxu0 0.0
    %242 = vmatprep.subr.mxu0 0.0
    %243 = vmatpush1.msra.mxu0 0.0
    %244 = vmatprep.subr.mxu0 0.0
    %245 = vmatpush1.msra.mxu0 0.0
    %246 = vmatprep.subr.mxu0 0.0
    %247 = vmatpush1.msra.mxu0 0.0
    %248 = vmatprep.subr.mxu0 0.0
    %249 = vmatpush1.msra.mxu0 0.0
    %250 = vmatprep.subr.mxu0 0.0
    %251 = vmatpush1.msra.mxu0 0.0
    %252 = vmatprep.subr.mxu0 0.0
    %253 = vmatpush1.msra.mxu0 0.0
    %254 = vmatprep.subr.mxu0 0.0
    %255 = vmatpush1.msra.mxu0 0.0
    %256 = vmatprep.subr.mxu0 0.0
    %257 = vmatpush1.msra.mxu0 0.0
    %258 = vmatprep.mubr.f32.mxu0 0.0
    %259 = vmatmul.mubr.f32.gmra.mrb[0].mxu0 %v85
    %v260 = vpop.f32.mrb[0].mxu0
    %v261 = vadd.f32 %v191, %v260
    %v262 = vpop.f32.mrb[0].mxu0
    %263 = vdwg.mxu0
    %264 = vset.pattern.permute.xlu0 2
    %265 = vperm.xlu0 %264, %v77
    %v266 = vpop.permute.xlu0 %265
    %vm267 = vcmp.eq.s32.totalorder %v266, %v79
    %v268 = vsel %vm267, 1, 0
    %v269 = vcvt.s32.f32 %v268
    %270 = vset.pattern.permute.xlu0 3
    %271 = vperm.xlu0 %270, %v77
    %v272 = vpop.permute.xlu0 %271
    %vm273 = vcmp.eq.s32.totalorder %v272, %v79
    %v274 = vsel %vm273, 1, 0
    %v275 = vcvt.s32.f32 %v274
    %v276 = vadd.f32 %v269, %v275
    %277 = vset.pattern.permute.xlu0 4
    %278 = vperm.xlu0 %277, %v77
    %v279 = vpop.permute.xlu0 %278
    %vm280 = vcmp.eq.s32.totalorder %v279, %v79
    %v281 = vsel %vm280, 1, 0
    %v282 = vcvt.s32.f32 %v281
    %v283 = vadd.f32 %v276, %v282
    %284 = vset.pattern.permute.xlu0 5
    %285 = vperm.xlu0 %284, %v77
    %v286 = vpop.permute.xlu0 %285
    %vm287 = vcmp.eq.s32.totalorder %v286, %v79
    %v288 = vsel %vm287, 1, 0
    %v289 = vcvt.s32.f32 %v288
    %v290 = vadd.f32 %v283, %v289
    %v291 = vld [vmem:[#allocation5] sm:$0xff]
    %v292 = vld [vmem:[#allocation5 + $0x8] sm:$0xff]
    %v293 = vld [vmem:[#allocation5 + $0x10] sm:$0xff]
    %v294 = vld [vmem:[#allocation5 + $0x18] sm:$0xff]
    %v295 = vld [vmem:[#allocation5 + $0x20] sm:$0xff]
    %v296 = vld [vmem:[#allocation5 + $0x28] sm:$0xff]
    %v297 = vld [vmem:[#allocation5 + $0x30] sm:$0xff]
    %v298 = vld [vmem:[#allocation5 + $0x38] sm:$0xff]
    %v299 = vld [vmem:[#allocation5 + $0x40] sm:$0xff]
    %v300 = vld [vmem:[#allocation5 + $0x48] sm:$0xff]
    %v301 = vld [vmem:[#allocation5 + $0x50] sm:$0xff]
    %v302 = vld [vmem:[#allocation5 + $0x58] sm:$0xff]
    %v303 = vld [vmem:[#allocation5 + $0x60] sm:$0xff]
    %v304 = vld [vmem:[#allocation5 + $0x68] sm:$0xff]
    %v305 = vld [vmem:[#allocation5 + $0x70] sm:$0xff]
    %v306 = vld [vmem:[#allocation5 + $0x78] sm:$0xff]
    %307 = vmatprep.subr.mxu0 0.0
    %308 = vmatpush1.msra.mxu0 %v291
    %309 = vmatprep.subr.mxu0 0.0
    %310 = vmatpush1.msra.mxu0 %v292
    %311 = vmatprep.subr.mxu0 0.0
    %312 = vmatpush1.msra.mxu0 %v293
    %313 = vmatprep.subr.mxu0 0.0
    %314 = vmatpush1.msra.mxu0 %v294
    %315 = vmatprep.subr.mxu0 0.0
    %316 = vmatpush1.msra.mxu0 %v295
    %317 = vmatprep.subr.mxu0 0.0
    %318 = vmatpush1.msra.mxu0 %v296
    %319 = vmatprep.subr.mxu0 0.0
    %320 = vmatpush1.msra.mxu0 %v297
    %321 = vmatprep.subr.mxu0 0.0
    %322 = vmatpush1.msra.mxu0 %v298
    %323 = vmatprep.subr.mxu0 0.0
    %324 = vmatpush1.msra.mxu0 %v299
    %325 = vmatprep.subr.mxu0 0.0
    %326 = vmatpush1.msra.mxu0 %v300
    %327 = vmatprep.subr.mxu0 0.0
    %328 = vmatpush1.msra.mxu0 %v301
    %329 = vmatprep.subr.mxu0 0.0
    %330 = vmatpush1.msra.mxu0 %v302
    %331 = vmatprep.subr.mxu0 0.0
    %332 = vmatpush1.msra.mxu0 %v303
    %333 = vmatprep.subr.mxu0 0.0
    %334 = vmatpush1.msra.mxu0 %v304
    %335 = vmatprep.subr.mxu0 0.0
    %336 = vmatpush1.msra.mxu0 %v305
    %337 = vmatprep.subr.mxu0 0.0
    %338 = vmatpush1.msra.mxu0 %v306
    %339 = vmatprep.subr.mxu0 0.0
    %340 = vmatpush1.msra.mxu0 0.0
    %341 = vmatprep.subr.mxu0 0.0
    %342 = vmatpush1.msra.mxu0 0.0
    %343 = vmatprep.subr.mxu0 0.0
    %344 = vmatpush1.msra.mxu0 0.0
    %345 = vmatprep.subr.mxu0 0.0
    %346 = vmatpush1.msra.mxu0 0.0
    %347 = vmatprep.subr.mxu0 0.0
    %348 = vmatpush1.msra.mxu0 0.0
    %349 = vmatprep.subr.mxu0 0.0
    %350 = vmatpush1.msra.mxu0 0.0
    %351 = vmatprep.subr.mxu0 0.0
    %352 = vmatpush1.msra.mxu0 0.0
    %353 = vmatprep.subr.mxu0 0.0
    %354 = vmatpush1.msra.mxu0 0.0
    %355 = vmatprep.subr.mxu0 0.0
    %356 = vmatpush1.msra.mxu0 0.0
    %357 = vmatprep.subr.mxu0 0.0
    %358 = vmatpush1.msra.mxu0 0.0
    %359 = vmatprep.subr.mxu0 0.0
    %360 = vmatpush1.msra.mxu0 0.0
    %361 = vmatprep.subr.mxu0 0.0
    %362 = vmatpush1.msra.mxu0 0.0
    %363 = vmatprep.subr.mxu0 0.0
    %364 = vmatpush1.msra.mxu0 0.0
    %365 = vmatprep.subr.mxu0 0.0
    %366 = vmatpush1.msra.mxu0 0.0
    %367 = vmatprep.subr.mxu0 0.0
    %368 = vmatpush1.msra.mxu0 0.0
    %369 = vmatprep.subr.mxu0 0.0
    %370 = vmatpush1.msra.mxu0 0.0
    %371 = vmatprep.mubr.f32.mxu0 0.0
    %372 = vmatmul.mubr.f32.gmra.mrb[0].mxu0 %v290
    %v373 = vpop.f32.mrb[0].mxu0
    %v374 = vadd.f32 0.0, %v373
    %v375 = vpop.f32.mrb[0].mxu0
    %376 = vdwg.mxu0
    %v377 = vadd.f32 %v261, %v374
    %378 = vset.pattern.permute.xlu0 6
    %379 = vperm.xlu0 %378, %v77
    %v380 = vpop.permute.xlu0 %379
    %vm381 = vcmp.eq.s32.totalorder %v380, %v79
    %v382 = vsel %vm381, 1, 0
    %v383 = vcvt.s32.f32 %v382
    %384 = vset.pattern.permute.xlu0 7
    %385 = vperm.xlu0 %384, %v77
    %v386 = vpop.permute.xlu0 %385
    %vm387 = vcmp.eq.s32.totalorder %v386, %v79
    %v388 = vsel %vm387, 1, 0
    %v389 = vcvt.s32.f32 %v388
    %v390 = vadd.f32 %v383, %v389
    %391 = vset.pattern.permute.xlu0 8
    %392 = vperm.xlu0 %391, %v77
    %v393 = vpop.permute.xlu0 %392
    %vm394 = vcmp.eq.s32.totalorder %v393, %v79
    %v395 = vsel %vm394, 1, 0
    %v396 = vcvt.s32.f32 %v395
    %v397 = vadd.f32 %v390, %v396
    %398 = vset.pattern.permute.xlu0 9
    %399 = vperm.xlu0 %398, %v77
    %v400 = vpop.permute.xlu0 %399
    %vm401 = vcmp.eq.s32.totalorder %v400, %v79
    %v402 = vsel %vm401, 1, 0
    %v403 = vcvt.s32.f32 %v402
    %v404 = vadd.f32 %v397, %v403
    %405 = vset.pattern.permute.xlu0 10
    %406 = vperm.xlu0 %405, %v77
    %v407 = vpop.permute.xlu0 %406
    %vm408 = vcmp.eq.s32.totalorder %v407, %v79
    %v409 = vsel %vm408, 1, 0
    %v410 = vcvt.s32.f32 %v409
    %v411 = vadd.f32 %v404, %v410
    %412 = vset.pattern.permute.xlu0 11
    %413 = vperm.xlu0 %412, %v77
    %v414 = vpop.permute.xlu0 %413
    %vm415 = vcmp.eq.s32.totalorder %v414, %v79
    %v416 = vsel %vm415, 1, 0
    %v417 = vcvt.s32.f32 %v416
    %v418 = vadd.f32 %v411, %v417
    %v419 = vld [vmem:[#allocation7] sm:$0xff]
    %v420 = vld [vmem:[#allocation7 + $0x8] sm:$0xff]
    %v421 = vld [vmem:[#allocation7 + $0x10] sm:$0xff]
    %v422 = vld [vmem:[#allocation7 + $0x18] sm:$0xff]
    %v423 = vld [vmem:[#allocation7 + $0x20] sm:$0xff]
    %v424 = vld [vmem:[#allocation7 + $0x28] sm:$0xff]
    %v425 = vld [vmem:[#allocation7 + $0x30] sm:$0xff]
    %v426 = vld [vmem:[#allocation7 + $0x38] sm:$0xff]
    %v427 = vld [vmem:[#allocation7 + $0x40] sm:$0xff]
    %v428 = vld [vmem:[#allocation7 + $0x48] sm:$0xff]
    %v429 = vld [vmem:[#allocation7 + $0x50] sm:$0xff]
    %v430 = vld [vmem:[#allocation7 + $0x58] sm:$0xff]
    %v431 = vld [vmem:[#allocation7 + $0x60] sm:$0xff]
    %v432 = vld [vmem:[#allocation7 + $0x68] sm:$0xff]
    %v433 = vld [vmem:[#allocation7 + $0x70] sm:$0xff]
    %v434 = vld [vmem:[#allocation7 + $0x78] sm:$0xff]
    %435 = vmatprep.subr.mxu0 0.0
    %436 = vmatpush1.msra.mxu0 %v419
    %437 = vmatprep.subr.mxu0 0.0
    %438 = vmatpush1.msra.mxu0 %v420
    %439 = vmatprep.subr.mxu0 0.0
    %440 = vmatpush1.msra.mxu0 %v421
    %441 = vmatprep.subr.mxu0 0.0
    %442 = vmatpush1.msra.mxu0 %v422
    %443 = vmatprep.subr.mxu0 0.0
    %444 = vmatpush1.msra.mxu0 %v423
    %445 = vmatprep.subr.mxu0 0.0
    %446 = vmatpush1.msra.mxu0 %v424
    %447 = vmatprep.subr.mxu0 0.0
    %448 = vmatpush1.msra.mxu0 %v425
    %449 = vmatprep.subr.mxu0 0.0
    %450 = vmatpush1.msra.mxu0 %v426
    %451 = vmatprep.subr.mxu0 0.0
    %452 = vmatpush1.msra.mxu0 %v427
    %453 = vmatprep.subr.mxu0 0.0
    %454 = vmatpush1.msra.mxu0 %v428
    %455 = vmatprep.subr.mxu0 0.0
    %456 = vmatpush1.msra.mxu0 %v429
    %457 = vmatprep.subr.mxu0 0.0
    %458 = vmatpush1.msra.mxu0 %v430
    %459 = vmatprep.subr.mxu0 0.0
    %460 = vmatpush1.msra.mxu0 %v431
    %461 = vmatprep.subr.mxu0 0.0
    %462 = vmatpush1.msra.mxu0 %v432
    %463 = vmatprep.subr.mxu0 0.0
    %464 = vmatpush1.msra.mxu0 %v433
    %465 = vmatprep.subr.mxu0 0.0
    %466 = vmatpush1.msra.mxu0 %v434
    %467 = vmatprep.subr.mxu0 0.0
    %468 = vmatpush1.msra.mxu0 0.0
    %469 = vmatprep.subr.mxu0 0.0
    %470 = vmatpush1.msra.mxu0 0.0
    %471 = vmatprep.subr.mxu0 0.0
    %472 = vmatpush1.msra.mxu0 0.0
    %473 = vmatprep.subr.mxu0 0.0
    %474 = vmatpush1.msra.mxu0 0.0
    %475 = vmatprep.subr.mxu0 0.0
    %476 = vmatpush1.msra.mxu0 0.0
    %477 = vmatprep.subr.mxu0 0.0
    %478 = vmatpush1.msra.mxu0 0.0
    %479 = vmatprep.subr.mxu0 0.0
    %480 = vmatpush1.msra.mxu0 0.0
    %481 = vmatprep.subr.mxu0 0.0
    %482 = vmatpush1.msra.mxu0 0.0
    %483 = vmatprep.subr.mxu0 0.0
    %484 = vmatpush1.msra.mxu0 0.0
    %485 = vmatprep.subr.mxu0 0.0
    %486 = vmatpush1.msra.mxu0 0.0
    %487 = vmatprep.subr.mxu0 0.0
    %488 = vmatpush1.msra.mxu0 0.0
    %489 = vmatprep.subr.mxu0 0.0
    %490 = vmatpush1.msra.mxu0 0.0
    %491 = vmatprep.subr.mxu0 0.0
    %492 = vmatpush1.msra.mxu0 0.0
    %493 = vmatprep.subr.mxu0 0.0
    %494 = vmatpush1.msra.mxu0 0.0
    %495 = vmatprep.subr.mxu0 0.0
    %496 = vmatpush1.msra.mxu0 0.0
    %497 = vmatprep.subr.mxu0 0.0
    %498 = vmatpush1.msra.mxu0 0.0
    %499 = vmatprep.mubr.f32.mxu0 0.0
    %500 = vmatmul.mubr.f32.gmra.mrb[0].mxu0 %v418
    %v501 = vpop.f32.mrb[0].mxu0
    %v502 = vadd.f32 0.0, %v501
    %v503 = vpop.f32.mrb[0].mxu0
    %504 = vdwg.mxu0
    %v505 = vadd.f32 %v377, %v502
    %v506 = vld [vmem:[%s1] sm:$0xff]
    %v507 = vld [vmem:[%s6] sm:$0x1]
    %509 = vset.pattern.permute.xlu0 0
    %510 = vperm.xlu0 %509, %v506
    %v511 = vpop.permute.xlu0 %510
    %v513 = vlaneseq
    %v514 = vshrl.u32 %v513, 7
    %v515 = vsub.s32 0, %v514
    %v516 = vrot.slane %v507, %v515
    %v517 = vmul.f32 %v511, %v516
    %v518 = vadd.f32 %v505, %v517
    %v519 = vld [vmem:[%s6 + $0x1] sm:$0x1]
    %520 = vset.pattern.permute.xlu0 1
    %521 = vperm.xlu0 %520, %v506
    %v522 = vpop.permute.xlu0 %521
    %v524 = vlaneseq
    %v525 = vshrl.u32 %v524, 7
    %v526 = vsub.s32 0, %v525
    %v527 = vrot.slane %v519, %v526
    %v528 = vmul.f32 %v522, %v527
    %v529 = vadd.f32 %v518, %v528
    %v530 = vld [vmem:[%s7] sm:$0x1]
    %v532 = vlaneseq
    %v533 = vshrl.u32 %v532, 7
    %v534 = vsub.s32 0, %v533
    %v535 = vrot.slane %v530, %v534
    %v537 = vadd.f32 %v529, %v535
    %v538 = vmax.f32 %v537, 0.0
    %v539 = vld [vmem:[%s8] sm:$0xff]
    %v540 = vld [vmem:[%s8 + $0x8] sm:$0xff]
    %v541 = vld [vmem:[%s8 + $0x10] sm:$0xff]
    %v542 = vld [vmem:[%s8 + $0x18] sm:$0xff]
    %v543 = vld [vmem:[%s8 + $0x20] sm:$0xff]
    %v544 = vld [vmem:[%s8 + $0x28] sm:$0xff]
    %v545 = vld [vmem:[%s8 + $0x30] sm:$0xff]
    %v546 = vld [vmem:[%s8 + $0x38] sm:$0xff]
    %v547 = vld [vmem:[%s8 + $0x40] sm:$0xff]
    %v548 = vld [vmem:[%s8 + $0x48] sm:$0xff]
    %v549 = vld [vmem:[%s8 + $0x50] sm:$0xff]
    %v550 = vld [vmem:[%s8 + $0x58] sm:$0xff]
    %v551 = vld [vmem:[%s8 + $0x60] sm:$0xff]
    %v552 = vld [vmem:[%s8 + $0x68] sm:$0xff]
    %v553 = vld [vmem:[%s8 + $0x70] sm:$0xff]
    %v554 = vld [vmem:[%s8 + $0x78] sm:$0xff]
    %v555 = vld [vmem:[%s9] sm:$0x1]
    %v557 = vlaneseq
    %v558 = vshrl.u32 %v557, 7
    %v559 = vsub.s32 0, %v558
    %v560 = vrot.slane %v555, %v559
    %562 = vmatprep.subr.mxu0 0.0
    %563 = vmatpush1.msra.mxu0 %v539
    %564 = vmatprep.subr.mxu0 0.0
    %565 = vmatpush1.msra.mxu0 %v540
    %566 = vmatprep.subr.mxu0 0.0
    %567 = vmatpush1.msra.mxu0 %v541
    %568 = vmatprep.subr.mxu0 0.0
    %569 = vmatpush1.msra.mxu0 %v542
    %570 = vmatprep.subr.mxu0 0.0
    %571 = vmatpush1.msra.mxu0 %v543
    %572 = vmatprep.subr.mxu0 0.0
    %573 = vmatpush1.msra.mxu0 %v544
    %574 = vmatprep.subr.mxu0 0.0
    %575 = vmatpush1.msra.mxu0 %v545
    %576 = vmatprep.subr.mxu0 0.0
    %577 = vmatpush1.msra.mxu0 %v546
    %578 = vmatprep.subr.mxu0 0.0
    %579 = vmatpush1.msra.mxu0 %v547
    %580 = vmatprep.subr.mxu0 0.0
    %581 = vmatpush1.msra.mxu0 %v548
    %582 = vmatprep.subr.mxu0 0.0
    %583 = vmatpush1.msra.mxu0 %v549
    %584 = vmatprep.subr.mxu0 0.0
    %585 = vmatpush1.msra.mxu0 %v550
    %586 = vmatprep.subr.mxu0 0.0
    %587 = vmatpush1.msra.mxu0 %v551
    %588 = vmatprep.subr.mxu0 0.0
    %589 = vmatpush1.msra.mxu0 %v552
    %590 = vmatprep.subr.mxu0 0.0
    %591 = vmatpush1.msra.mxu0 %v553
    %592 = vmatprep.subr.mxu0 0.0
    %593 = vmatpush1.msra.mxu0 %v554
    %594 = vmatprep.subr.mxu0 0.0
    %595 = vmatpush1.msra.mxu0 0.0
    %596 = vmatprep.subr.mxu0 0.0
    %597 = vmatpush1.msra.mxu0 0.0
    %598 = vmatprep.subr.mxu0 0.0
    %599 = vmatpush1.msra.mxu0 0.0
    %600 = vmatprep.subr.mxu0 0.0
    %601 = vmatpush1.msra.mxu0 0.0
    %602 = vmatprep.subr.mxu0 0.0
    %603 = vmatpush1.msra.mxu0 0.0
    %604 = vmatprep.subr.mxu0 0.0
    %605 = vmatpush1.msra.mxu0 0.0
    %606 = vmatprep.subr.mxu0 0.0
    %607 = vmatpush1.msra.mxu0 0.0
    %608 = vmatprep.subr.mxu0 0.0
    %609 = vmatpush1.msra.mxu0 0.0
    %610 = vmatprep.subr.mxu0 0.0
    %611 = vmatpush1.msra.mxu0 0.0
    %612 = vmatprep.subr.mxu0 0.0
    %613 = vmatpush1.msra.mxu0 0.0
    %614 = vmatprep.subr.mxu0 0.0
    %615 = vmatpush1.msra.mxu0 0.0
    %616 = vmatprep.subr.mxu0 0.0
    %617 = vmatpush1.msra.mxu0 0.0
    %618 = vmatprep.subr.mxu0 0.0
    %619 = vmatpush1.msra.mxu0 0.0
    %620 = vmatprep.subr.mxu0 0.0
    %621 = vmatpush1.msra.mxu0 0.0
    %622 = vmatprep.subr.mxu0 0.0
    %623 = vmatpush1.msra.mxu0 0.0
    %624 = vmatprep.subr.mxu0 0.0
    %625 = vmatpush1.msra.mxu0 0.0
    %626 = vmatprep.mubr.f32.mxu0 0.0
    %627 = vmatmul.mubr.f32.gmra.mrb[0].mxu0 %v538
    %v628 = vpop.f32.mrb[0].mxu0
    %v629 = vadd.f32 %v560, %v628
    %v630 = vpop.f32.mrb[0].mxu0
    %631 = vdwg.mxu0
    %vm632 = vcmask 523264
    %633 = vst.msk [vmem:[#allocation8] sm:$0xff] %vm632, %v629
    // Predicated region
    $region54: #{tpu_custom_call.1} parent=1 // pred_check
      _
    $region55: #{tpu_custom_call.1} parent=1 // pred_check_branch
      %635 = sbr.rel (0) target = $region57
    $region56: #{tpu_custom_call.1} parent=1 // pred_region
      %s637 = ssub.s32 128, 128
      %638 = vsyncadd [#allocation4], %s637
      %s640 = sshll.u32 [#allocation8], 4
      %s641 = int_to_ptr.vmem [resolvable:$true] %s640
      %643 = dma.vmem_to_hbm [thread:$0]  %s641, 128, %s10, [#allocation4]
    $region57: #{tpu_custom_call.1} parent=1 // pred_fallthru
      _
    // Predicated region
    $region58: #{tpu_custom_call.1} parent=1 // pred_check
      _
    $region59: #{tpu_custom_call.1} parent=1 // pred_check_branch
      %645 = sbr.rel (0) target = $region61
    $region60: #{tpu_custom_call.1} parent=1 // pred_region
      %646 = dma.done [#allocation4], 128
    $region61: #{tpu_custom_call.1} parent=1 // pred_fallthru
      _
    %647 = vsyncpa [#allocation3], 1
    %648 = vsyncpa [#allocation6], 1
    %649 = vsyncpa [#allocation4], 1

</llo_original>
